<compile_context>
chip_gen: v7x
topology: tpu7x:2x2x1
jax: 0.10.0
libtpu: 0.0.40
codegen_flags: <defaults>
</compile_context>

<pallas_src>
import math

import jax
import jax.numpy as jnp
from jax.experimental import pallas as pl
from jax.experimental.pallas import tpu as pltpu


def _ae_classifier_kernel(x_ref, w_enc_ref, b_enc_ref, w_out_ref, b_out_ref,
                          w_dec_ref, b_dec_ref, recon_ref, labels_ref):
    tb, s, d_p = x_ref.shape                       # block: (tile_b, S, D_pad)

    # ---- ae.encode(X): collapse (b, s) -> M so the MXU sees one tall matmul ----
    x2d = x_ref[...].reshape(tb * s, d_p)          # bf16 [M, D_p]
    pre = jnp.dot(x2d, w_enc_ref[...],
                  preferred_element_type=jnp.float32) + b_enc_ref[...]
    temporal2d = jnp.tanh(pre)                     # f32 [M, H_p]
    temporal = temporal2d.reshape(tb, s, -1)       # [tb, S, H_p]
    context = jnp.mean(temporal, axis=1)           # [tb, H_p]

    # ---- classifier head: Linear(encoded_dim, n_classes) + Softmax(dim=-1) ----
    logits = jnp.dot(context.astype(jnp.bfloat16), w_out_ref[...],
                     preferred_element_type=jnp.float32) + b_out_ref[...]
    m = jnp.max(logits, axis=-1, keepdims=True)
    e = jnp.exp(logits - m)                        # padded classes -> exp(-1e30) = 0
    labels_ref[...] = e * pl.reciprocal(jnp.sum(e, axis=-1, keepdims=True),
                                        approx=True)

    # ---- ae.decode(temporal_output, context) ----
    h2d = (temporal + context[:, None, :]).reshape(tb * s, -1)
    recon = jnp.dot(h2d.astype(jnp.bfloat16), w_dec_ref[...],
                    preferred_element_type=jnp.float32) + b_dec_ref[...]
    recon_ref[...] = recon.reshape(tb, s, d_p)


def _round_up(n, m):
    return ((n + m - 1) // m) * m


def _pick_tile_b(B, S):
    """Batch rows per block (each block holds whole sequences so the seq-mean and
    classifier stay local).  Multiple of 8 unless the whole batch fits in one block."""
    if B <= 8:
        return B
    rows_target = 2048                             # ~tile_b*S rows/block: a few MiB VMEM
    tb = max(8, (max(1, rows_target // S) // 8) * 8)
    return min(tb, _round_up(B, 8))


def autoencoder_classifier_forward(x, params):
    """Returns (x_reconstruction, label_predictions) — the two fields of
    AutoencoderClassifierOutput."""
    B, S, D = x.shape
    H = params['w_enc'].shape[1]
    C = params['w_out'].shape[0]

    LANE = 128
    D_p, H_p, C_p = _round_up(D, LANE), _round_up(H, LANE), _round_up(C, LANE)
    tile_b = _pick_tile_b(B, S)
    B_p = _round_up(B, tile_b)
    grid = (B_p // tile_b,)

    f32, bf16 = jnp.float32, jnp.bfloat16
    # Lane-pad everything in JAX glue; bf16 for the MXU operands, f32 biases.
    x_p = jnp.zeros((B_p, S, D_p), bf16).at[:B, :, :D].set(x.astype(bf16))
    w_enc = jnp.zeros((D_p, H_p), bf16).at[:D, :H].set(params['w_enc'].astype(bf16))
    b_enc = jnp.zeros((1, H_p), f32).at[:, :H].set(params['b_enc'].reshape(1, H))
    # classifier head: pre-transpose to [H, C]; padded classes get -1e30 bias so the
    # softmax over the padded width equals the softmax over the real C classes.
    w_out_t = jnp.zeros((H_p, C_p), bf16).at[:H, :C].set(params['w_out'].T.astype(bf16))
    b_out = jnp.full((1, C_p), -1e30, f32).at[:, :C].set(params['b_out'].reshape(1, C))
    w_dec = jnp.zeros((H_p, D_p), bf16).at[:H, :D].set(params['w_dec'].astype(bf16))
    b_dec = jnp.zeros((1, D_p), f32).at[:, :D].set(params['b_dec'].reshape(1, D))

    flops = 2 * B_p * S * (D_p * H_p + H_p * D_p) + 2 * B_p * H_p * C_p
    transcendentals = B_p * S * H_p + B_p * C_p
    bytes_accessed = (2 * B_p * S * D_p                       # x (bf16)
                      + 4 * B_p * S * D_p                     # recon (f32)
                      + 2 * (2 * D_p * H_p + H_p * C_p)       # weights (bf16)
                      + 4 * (H_p + C_p + D_p + B_p * C_p))    # biases + labels (f32)

    recon_p, labels_p = pl.pallas_call(
        _ae_classifier_kernel,
        out_shape=(jax.ShapeDtypeStruct((B_p, S, D_p), f32),
                   jax.ShapeDtypeStruct((B_p, C_p), f32)),
        grid=grid,
        in_specs=[
            pl.BlockSpec((tile_b, S, D_p), lambda i: (i, 0, 0)),   # X tile
            pl.BlockSpec((D_p, H_p), lambda i: (0, 0)),            # W_enc (resident)
            pl.BlockSpec((1, H_p), lambda i: (0, 0)),              # b_enc
            pl.BlockSpec((H_p, C_p), lambda i: (0, 0)),            # W_out^T
            pl.BlockSpec((1, C_p), lambda i: (0, 0)),              # b_out
            pl.BlockSpec((H_p, D_p), lambda i: (0, 0)),            # W_dec
            pl.BlockSpec((1, D_p), lambda i: (0, 0)),              # b_dec
        ],
        out_specs=(
            pl.BlockSpec((tile_b, S, D_p), lambda i: (i, 0, 0)),   # reconstruction
            pl.BlockSpec((tile_b, C_p), lambda i: (i, 0)),         # label predictions
        ),
        compiler_params=pltpu.CompilerParams(
            dimension_semantics=("parallel",),          # shards blocks across v7x's 2 TCs
            vmem_limit_bytes=48 * 1024 * 1024,          # headroom under v7x's 64 MiB VMEM
        ),
        cost_estimate=pl.CostEstimate(flops=flops,
                                      transcendentals=transcendentals,
                                      bytes_accessed=bytes_accessed),
    )(x_p, w_enc, b_enc, w_out_t, b_out, w_dec, b_dec)

    # Slice away the lane/batch padding.
    return recon_p[:B, :, :D], labels_p[:B, :C]


def init_params(key, d_in, hidden, n_classes):
    k1, k2, k3, k4 = jax.random.split(key, 4)
    # synthetic AE parameters (deterministic)
    w_enc = jax.random.normal(k1, (d_in, hidden), jnp.float32) * (1.0 / math.sqrt(d_in))
    b_enc = jnp.zeros((hidden,), jnp.float32)
    w_dec = jax.random.normal(k2, (hidden, d_in), jnp.float32) * (1.0 / math.sqrt(hidden))
    b_dec = jnp.zeros((d_in,), jnp.float32)
    # classifier head: xavier_uniform_ on weight (as in the module), default-style bias
    a = math.sqrt(6.0 / (hidden + n_classes))
    w_out = jax.random.uniform(k3, (n_classes, hidden), jnp.float32, minval=-a, maxval=a)
    bb = 1.0 / math.sqrt(hidden)
    b_out = jax.random.uniform(k4, (n_classes,), jnp.float32, minval=-bb, maxval=bb)
    return {'w_enc': w_enc, 'b_enc': b_enc,
            'w_dec': w_dec, 'b_dec': b_dec,
            'w_out': w_out, 'b_out': b_out}


if __name__ == "__main__":
    # Small shapes: batch=2, seq=8, features=16, encoded_dim=32, n_classes=4
    B, S, D, H, C = 2, 8, 16, 32, 4
    key = jax.random.PRNGKey(0)
    kx, kp = jax.random.split(key)
    x = jax.random.normal(kx, (B, S, D), jnp.float32)
    params = init_params(kp, D, H, C)

    recon, labels = autoencoder_classifier_forward(x, params)
    jax.block_until_ready((recon, labels))

    assert recon.shape == (B, S, D)
    assert labels.shape == (B, C)
    # softmax rows sum to 1 (approx reciprocal -> loose tolerance)
    assert bool(jnp.allclose(jnp.sum(labels, axis=-1), 1.0, atol=1e-2))

    # pure-JAX f32 reference (loose tolerance: kernel uses bf16 MXU operands)
    temporal_ref = jnp.tanh(jnp.einsum('bsd,dh->bsh', x, params['w_enc']) + params['b_enc'])
    context_ref = jnp.mean(temporal_ref, axis=1)
    logits_ref = context_ref @ params['w_out'].T + params['b_out']
    labels_ref = jax.nn.softmax(logits_ref, axis=-1)
    recon_ref = jnp.einsum('bsh,hd->bsd', temporal_ref + context_ref[:, None, :],
                           params['w_dec']) + params['b_dec']
    assert bool(jnp.allclose(labels, labels_ref, atol=5e-2))
    assert bool(jnp.allclose(recon, recon_ref, atol=1.5e-1))

    print("KERNEL_OK")
</pallas_src>

<mosaic_0001>
module attributes {stable_mosaic.version = 11 : i64} {
  func.func @_ae_classifier_kernel(%arg0: i32, %arg1: memref<2x8x128xbf16, #tpu.memory_space<vmem>>, %arg2: memref<128x128xbf16, #tpu.memory_space<vmem>>, %arg3: memref<1x128xf32, #tpu.memory_space<vmem>>, %arg4: memref<128x128xbf16, #tpu.memory_space<vmem>>, %arg5: memref<1x128xf32, #tpu.memory_space<vmem>>, %arg6: memref<128x128xbf16, #tpu.memory_space<vmem>>, %arg7: memref<1x128xf32, #tpu.memory_space<vmem>>, %arg8: memref<2x8x128xf32, #tpu.memory_space<vmem>>, %arg9: memref<2x128xf32, #tpu.memory_space<vmem>>) attributes {dimension_semantics = [#tpu.dimension_semantics<parallel>], iteration_bounds = array<i64: 1>, scalar_prefetch = 0 : i64, scratch_operands = 0 : i64, tpu.core_type = #tpu.core_type<tc>, window_params = [{transform_indices = @transform_0, window_bounds = array<i64: 2, 8, 128>}, {pipeline_mode = #tpu.pipeline_mode<synchronous>, transform_indices = @transform_1, window_bounds = array<i64: 128, 128>}, {pipeline_mode = #tpu.pipeline_mode<synchronous>, transform_indices = @transform_2, window_bounds = array<i64: 1, 128>}, {pipeline_mode = #tpu.pipeline_mode<synchronous>, transform_indices = @transform_3, window_bounds = array<i64: 128, 128>}, {pipeline_mode = #tpu.pipeline_mode<synchronous>, transform_indices = @transform_4, window_bounds = array<i64: 1, 128>}, {pipeline_mode = #tpu.pipeline_mode<synchronous>, transform_indices = @transform_5, window_bounds = array<i64: 128, 128>}, {pipeline_mode = #tpu.pipeline_mode<synchronous>, transform_indices = @transform_6, window_bounds = array<i64: 1, 128>}, {transform_indices = @transform_7, window_bounds = array<i64: 2, 8, 128>}, {transform_indices = @transform_8, window_bounds = array<i64: 2, 128>}]} {
    %c0 = arith.constant 0 : index
    %c0_0 = arith.constant 0 : index
    %c0_1 = arith.constant 0 : index
    %0 = vector.load %arg1[%c0, %c0_0, %c0_1] : memref<2x8x128xbf16, #tpu.memory_space<vmem>>, vector<2x8x128xbf16>
    %1 = vector.shape_cast %0 : vector<2x8x128xbf16> to vector<16x128xbf16>
    %c0_2 = arith.constant 0 : index
    %c0_3 = arith.constant 0 : index
    %2 = vector.load %arg2[%c0_2, %c0_3] : memref<128x128xbf16, #tpu.memory_space<vmem>>, vector<128x128xbf16>
    %cst = arith.constant dense<0.000000e+00> : vector<16x128xf32>
    %3 = tpu.matmul %1, %2, %cst {dimension_numbers = #tpu.dot_dimension_numbers<[1], [0], [0], [1], [0, 0, 1, 1], [], []>} : vector<16x128xbf16>, vector<128x128xbf16>, vector<16x128xf32> -> vector<16x128xf32>
    %c0_4 = arith.constant 0 : index
    %c0_5 = arith.constant 0 : index
    %4 = vector.load %arg3[%c0_4, %c0_5] : memref<1x128xf32, #tpu.memory_space<vmem>>, vector<1x128xf32>
    %5 = vector.broadcast %4 : vector<1x128xf32> to vector<16x128xf32>
    %6 = arith.addf %3, %5 : vector<16x128xf32>
    %7 = math.tanh %6 : vector<16x128xf32>
    %8 = vector.shape_cast %7 : vector<16x128xf32> to vector<2x8x128xf32>
    %cst_6 = arith.constant dense<0.000000e+00> : vector<2x128xf32>
    %9 = vector.multi_reduction <add>, %8, %cst_6 [1] : vector<2x8x128xf32> to vector<2x128xf32>
    %cst_7 = arith.constant 8.000000e+00 : f32
    %10 = vector.broadcast %cst_7 : f32 to vector<2x128xf32>
    %11 = arith.divf %9, %10 : vector<2x128xf32>
    %12 = arith.truncf %11 : vector<2x128xf32> to vector<2x128xbf16>
    %c0_8 = arith.constant 0 : index
    %c0_9 = arith.constant 0 : index
    %13 = vector.load %arg4[%c0_8, %c0_9] : memref<128x128xbf16, #tpu.memory_space<vmem>>, vector<128x128xbf16>
    %cst_10 = arith.constant dense<0.000000e+00> : vector<2x128xf32>
    %14 = tpu.matmul %12, %13, %cst_10 {dimension_numbers = #tpu.dot_dimension_numbers<[1], [0], [0], [1], [0, 0, 1, 1], [], []>} : vector<2x128xbf16>, vector<128x128xbf16>, vector<2x128xf32> -> vector<2x128xf32>
    %c0_11 = arith.constant 0 : index
    %c0_12 = arith.constant 0 : index
    %15 = vector.load %arg5[%c0_11, %c0_12] : memref<1x128xf32, #tpu.memory_space<vmem>>, vector<1x128xf32>
    %16 = vector.broadcast %15 : vector<1x128xf32> to vector<2x128xf32>
    %17 = arith.addf %14, %16 : vector<2x128xf32>
    %cst_13 = arith.constant dense<0xFF800000> : vector<2xf32>
    %18 = vector.multi_reduction <maximumf>, %17, %cst_13 [1] : vector<2x128xf32> to vector<2xf32>
    %19 = vector.shape_cast %18 : vector<2xf32> to vector<2x1xf32>
    %20 = vector.broadcast %19 : vector<2x1xf32> to vector<2x128xf32>
    %21 = arith.subf %17, %20 : vector<2x128xf32>
    %22 = math.exp %21 : vector<2x128xf32>
    %cst_14 = arith.constant dense<0.000000e+00> : vector<2xf32>
    %23 = vector.multi_reduction <add>, %22, %cst_14 [1] : vector<2x128xf32> to vector<2xf32>
    %24 = vector.shape_cast %23 : vector<2xf32> to vector<2x1xf32>
    %25 = tpu.reciprocal %24 {approx = true} : vector<2x1xf32> -> vector<2x1xf32>
    %26 = vector.broadcast %25 : vector<2x1xf32> to vector<2x128xf32>
    %27 = arith.mulf %22, %26 : vector<2x128xf32>
    %c0_15 = arith.constant 0 : index
    %c0_16 = arith.constant 0 : index
    %28 = vector.load %arg9[%c0_15, %c0_16] : memref<2x128xf32, #tpu.memory_space<vmem>>, vector<2x128xf32>
    tpu.vector_store %arg9[%c0_15, %c0_16], %27 {strides = array<i32>} : memref<2x128xf32, #tpu.memory_space<vmem>>, vector<2x128xf32>,
    %29 = vector.shape_cast %11 : vector<2x128xf32> to vector<2x1x128xf32>
    %30 = vector.broadcast %29 : vector<2x1x128xf32> to vector<2x8x128xf32>
    %31 = arith.addf %8, %30 : vector<2x8x128xf32>
    %32 = vector.shape_cast %31 : vector<2x8x128xf32> to vector<16x128xf32>
    %33 = arith.truncf %32 : vector<16x128xf32> to vector<16x128xbf16>
    %c0_17 = arith.constant 0 : index
    %c0_18 = arith.constant 0 : index
    %34 = vector.load %arg6[%c0_17, %c0_18] : memref<128x128xbf16, #tpu.memory_space<vmem>>, vector<128x128xbf16>
    %cst_19 = arith.constant dense<0.000000e+00> : vector<16x128xf32>
    %35 = tpu.matmul %33, %34, %cst_19 {dimension_numbers = #tpu.dot_dimension_numbers<[1], [0], [0], [1], [0, 0, 1, 1], [], []>} : vector<16x128xbf16>, vector<128x128xbf16>, vector<16x128xf32> -> vector<16x128xf32>
    %c0_20 = arith.constant 0 : index
    %c0_21 = arith.constant 0 : index
    %36 = vector.load %arg7[%c0_20, %c0_21] : memref<1x128xf32, #tpu.memory_space<vmem>>, vector<1x128xf32>
    %37 = vector.broadcast %36 : vector<1x128xf32> to vector<16x128xf32>
    %38 = arith.addf %35, %37 : vector<16x128xf32>
    %39 = vector.shape_cast %38 : vector<16x128xf32> to vector<2x8x128xf32>
    %c0_22 = arith.constant 0 : index
    %c0_23 = arith.constant 0 : index
    %c0_24 = arith.constant 0 : index
    %40 = vector.load %arg8[%c0_22, %c0_23, %c0_24] : memref<2x8x128xf32, #tpu.memory_space<vmem>>, vector<2x8x128xf32>
    tpu.vector_store %arg8[%c0_22, %c0_23, %c0_24], %39 {strides = array<i32>} : memref<2x8x128xf32, #tpu.memory_space<vmem>>, vector<2x8x128xf32>,
    return
  }
  func.func @transform_0(%arg0: i32) -> (i32, i32, i32) {
    %c0_i32 = arith.constant 0 : i32
    %c0_i32_0 = arith.constant 0 : i32
    %c0_i32_1 = arith.constant 0 : i32
    return %arg0, %c0_i32, %c0_i32_0 : i32, i32, i32
  }
  func.func @transform_1(%arg0: i32) -> (i32, i32) {
    %c0_i32 = arith.constant 0 : i32
    %c0_i32_0 = arith.constant 0 : i32
    %c0_i32_1 = arith.constant 0 : i32
    return %c0_i32, %c0_i32_0 : i32, i32
  }
  func.func @transform_2(%arg0: i32) -> (i32, i32) {
    %c0_i32 = arith.constant 0 : i32
    %c0_i32_0 = arith.constant 0 : i32
    %c0_i32_1 = arith.constant 0 : i32
    return %c0_i32, %c0_i32_0 : i32, i32
  }
  func.func @transform_3(%arg0: i32) -> (i32, i32) {
    %c0_i32 = arith.constant 0 : i32
    %c0_i32_0 = arith.constant 0 : i32
    %c0_i32_1 = arith.constant 0 : i32
    return %c0_i32, %c0_i32_0 : i32, i32
  }
  func.func @transform_4(%arg0: i32) -> (i32, i32) {
    %c0_i32 = arith.constant 0 : i32
    %c0_i32_0 = arith.constant 0 : i32
    %c0_i32_1 = arith.constant 0 : i32
    return %c0_i32, %c0_i32_0 : i32, i32
  }
  func.func @transform_5(%arg0: i32) -> (i32, i32) {
    %c0_i32 = arith.constant 0 : i32
    %c0_i32_0 = arith.constant 0 : i32
    %c0_i32_1 = arith.constant 0 : i32
    return %c0_i32, %c0_i32_0 : i32, i32
  }
  func.func @transform_6(%arg0: i32) -> (i32, i32) {
    %c0_i32 = arith.constant 0 : i32
    %c0_i32_0 = arith.constant 0 : i32
    %c0_i32_1 = arith.constant 0 : i32
    return %c0_i32, %c0_i32_0 : i32, i32
  }
  func.func @transform_7(%arg0: i32) -> (i32, i32, i32) {
    %c0_i32 = arith.constant 0 : i32
    %c0_i32_0 = arith.constant 0 : i32
    %c0_i32_1 = arith.constant 0 : i32
    return %arg0, %c0_i32, %c0_i32_0 : i32, i32, i32
  }
  func.func @transform_8(%arg0: i32) -> (i32, i32) {
    %c0_i32 = arith.constant 0 : i32
    %c0_i32_0 = arith.constant 0 : i32
    return %arg0, %c0_i32 : i32, i32
  }
}

</mosaic_0001>

<llo_original>
// kernel: tpu_custom_call.1
$region0: #{tpu_custom_call.1}
  #allocation0 [shape = 'u32[]', space=smem, size = 0x4, offset = 0x4, fixed_abs, tag = 'smem constant byte address 0x4 - core index']
  #allocation1 [shape = 'u32[144,128]{1,0:T(1,128)}', space=vmem, size = 0x12000, scoped, tag = 'internal scratch']
  %s0 = inlined_call_operand.hbm [shape: bf16[2,8,128], index: 0, kind: input, shape index: {}]
  %s1 = inlined_call_operand.hbm [shape: bf16[128,128], index: 1, kind: input, shape index: {}]
  %s2 = inlined_call_operand.vmem [shape: f32[1,128], index: 2, kind: input, shape index: {}]
  %s3 = inlined_call_operand.hbm [shape: bf16[128,128], index: 3, kind: input, shape index: {}]
  %s4 = inlined_call_operand.vmem [shape: f32[1,128], index: 4, kind: input, shape index: {}]
  %s5 = inlined_call_operand.hbm [shape: bf16[128,128], index: 5, kind: input, shape index: {}]
  %s6 = inlined_call_operand.vmem [shape: f32[1,128], index: 6, kind: input, shape index: {}]
  %s7 = inlined_call_operand.hbm [shape: f32[2,8,128], index: 7, kind: output, shape index: {0}]
  %s8 = inlined_call_operand.hbm [shape: f32[2,128], index: 8, kind: output, shape index: {1}]
  %9 = xla_tuple %s7, %s8
  %s10 = sld [smem:[#allocation0]]
  $region62: #{tpu_custom_call.1} parent=0
    _
  %s12 = ssub.s32 1, %s10
  %s13 = scalar_select 0, %s12, %s10
  $region1: #{tpu_custom_call.1} parent=0
    #allocation2 [shape = 'u8[4096]{0}', space=vmem, size = 0x1000, scoped, tag = 'input window, operand 0, single buffered']
    #allocation3 [shape = 's32[1]{0}', space=sflag, size = 0x4, scoped, tag = 'scoped memory for tpu_custom_call.1']
    #allocation4 [shape = 's32[1]{0}', space=sflag, size = 0x4, scoped, tag = 'scoped memory for tpu_custom_call.1']
    #allocation5 [shape = 'u8[32768]{0}', space=vmem, size = 0x8000, scoped, tag = 'input window, operand 1, single buffered']
    #allocation6 [shape = 's32[1]{0}', space=sflag, size = 0x4, scoped, tag = 'scoped memory for tpu_custom_call.1']
    #allocation7 [shape = 'u8[32768]{0}', space=vmem, size = 0x8000, scoped, tag = 'input window, operand 3, single buffered']
    #allocation8 [shape = 'u8[32768]{0}', space=vmem, size = 0x8000, scoped, tag = 'input window, operand 5, single buffered']
    #allocation9 [shape = 's32[1]{0}', space=sflag, size = 0x4, scoped, tag = 'scoped memory for tpu_custom_call.1']
    #allocation10 [shape = 'u8[8192]{0}', space=vmem, size = 0x2000, scoped, tag = 'output window, operand 0, single buffered']
    #allocation11 [shape = 'u8[1024]{0}', space=vmem, size = 0x400, scoped, tag = 'output window, operand 1, single buffered']
    #allocation12 [shape = 's32[1]{0}', space=sflag, size = 0x4, scoped, tag = 'scoped memory for tpu_custom_call.1']
    %14 = vsyncpa [#allocation3], 0
    %15 = vsyncpa [#allocation6], 0
    %16 = vsyncpa [#allocation9], 0
    %17 = vsyncpa [#allocation4], 0
    %18 = vsyncpa [#allocation12], 0
    // Predicated region
    $region2: #{tpu_custom_call.1} parent=1 // pred_check
      _
    $region3: #{tpu_custom_call.1} parent=1 // pred_check_branch
      %20 = sbr.rel (0) target = $region5
    $region4: #{tpu_custom_call.1} parent=1 // pred_region
      %s22 = ssub.s32 128, 128
      %23 = vsyncadd [#allocation3], %s22
      %s24 = sshll.u32 [#allocation2], 4
      %s25 = int_to_ptr.vmem [resolvable:$true] %s24
      %30 = dma.hbm_to_vmem [thread:$0]  %s0, 128, %s25, [#allocation3], 64, 64, 4
    $region5: #{tpu_custom_call.1} parent=1 // pred_fallthru
      _
    // Predicated region
    $region6: #{tpu_custom_call.1} parent=1 // pred_check
      _
    $region7: #{tpu_custom_call.1} parent=1 // pred_check_branch
      %32 = sbr.rel (0) target = $region9
    $region8: #{tpu_custom_call.1} parent=1 // pred_region
      %s34 = ssub.s32 1024, 1024
      %35 = vsyncadd [#allocation6], %s34
      %s36 = sshll.u32 [#allocation5], 4
      %s37 = int_to_ptr.vmem [resolvable:$true] %s36
      %42 = dma.hbm_to_vmem [thread:$0]  %s1, 1024, %s37, [#allocation6], 64, 64, 4
    $region9: #{tpu_custom_call.1} parent=1 // pred_fallthru
      _
    // Predicated region
    $region10: #{tpu_custom_call.1} parent=1 // pred_check
      _
    $region11: #{tpu_custom_call.1} parent=1 // pred_check_branch
      %44 = sbr.rel (0) target = $region13
    $region12: #{tpu_custom_call.1} parent=1 // pred_region
      _
    $region13: #{tpu_custom_call.1} parent=1 // pred_fallthru
      _
    // Predicated region
    $region14: #{tpu_custom_call.1} parent=1 // pred_check
      _
    $region15: #{tpu_custom_call.1} parent=1 // pred_check_branch
      %46 = sbr.rel (0) target = $region17
    $region16: #{tpu_custom_call.1} parent=1 // pred_region
      %s48 = ssub.s32 1024, 1024
      %49 = vsyncadd [#allocation6], %s48
      %s50 = sshll.u32 [#allocation7], 4
      %s51 = int_to_ptr.vmem [resolvable:$true] %s50
      %56 = dma.hbm_to_vmem [thread:$0]  %s3, 1024, %s51, [#allocation6], 64, 64, 4
    $region17: #{tpu_custom_call.1} parent=1 // pred_fallthru
      _
    // Predicated region
    $region18: #{tpu_custom_call.1} parent=1 // pred_check
      _
    $region19: #{tpu_custom_call.1} parent=1 // pred_check_branch
      %58 = sbr.rel (0) target = $region21
    $region20: #{tpu_custom_call.1} parent=1 // pred_region
      _
    $region21: #{tpu_custom_call.1} parent=1 // pred_fallthru
      _
    // Predicated region
    $region22: #{tpu_custom_call.1} parent=1 // pred_check
      _
    $region23: #{tpu_custom_call.1} parent=1 // pred_check_branch
      %60 = sbr.rel (0) target = $region25
    $region24: #{tpu_custom_call.1} parent=1 // pred_region
      %s62 = ssub.s32 1024, 1024
      %63 = vsyncadd [#allocation9], %s62
      %s64 = sshll.u32 [#allocation8], 4
      %s65 = int_to_ptr.vmem [resolvable:$true] %s64
      %70 = dma.hbm_to_vmem [thread:$0]  %s5, 1024, %s65, [#allocation9], 64, 64, 4
    $region25: #{tpu_custom_call.1} parent=1 // pred_fallthru
      _
    // Predicated region
    $region26: #{tpu_custom_call.1} parent=1 // pred_check
      _
    $region27: #{tpu_custom_call.1} parent=1 // pred_check_branch
      %72 = sbr.rel (0) target = $region29
    $region28: #{tpu_custom_call.1} parent=1 // pred_region
      _
    $region29: #{tpu_custom_call.1} parent=1 // pred_fallthru
      _
    // Predicated region
    $region30: #{tpu_custom_call.1} parent=1 // pred_check
      _
    $region31: #{tpu_custom_call.1} parent=1 // pred_check_branch
      %74 = sbr.rel (0) target = $region33
    $region32: #{tpu_custom_call.1} parent=1 // pred_region
      %75 = dma.done [#allocation3], 128
    $region33: #{tpu_custom_call.1} parent=1 // pred_fallthru
      _
    // Predicated region
    $region34: #{tpu_custom_call.1} parent=1 // pred_check
      _
    $region35: #{tpu_custom_call.1} parent=1 // pred_check_branch
      %77 = sbr.rel (0) target = $region37
    $region36: #{tpu_custom_call.1} parent=1 // pred_region
      %78 = dma.done [#allocation6], 1024
    $region37: #{tpu_custom_call.1} parent=1 // pred_fallthru
      _
    // Predicated region
    $region38: #{tpu_custom_call.1} parent=1 // pred_check
      _
    $region39: #{tpu_custom_call.1} parent=1 // pred_check_branch
      %80 = sbr.rel (0) target = $region41
    $region40: #{tpu_custom_call.1} parent=1 // pred_region
      %81 = dma.done [#allocation6], 1024
    $region41: #{tpu_custom_call.1} parent=1 // pred_fallthru
      _
    // Predicated region
    $region42: #{tpu_custom_call.1} parent=1 // pred_check
      _
    $region43: #{tpu_custom_call.1} parent=1 // pred_check_branch
      %83 = sbr.rel (0) target = $region45
    $region44: #{tpu_custom_call.1} parent=1 // pred_region
      %84 = dma.done [#allocation9], 1024
    $region45: #{tpu_custom_call.1} parent=1 // pred_fallthru
      _
    %v86 = vld [vmem:[#allocation2] sm:$0xf]
    %v87 = vld [vmem:[#allocation2 + $0x4] sm:$0xf]
    %v88 = vld [vmem:[#allocation5] sm:$0xf]
    %v89 = vld [vmem:[#allocation5 + $0x4] sm:$0xf]
    %v90 = vld [vmem:[#allocation5 + $0x8] sm:$0xf]
    %v91 = vld [vmem:[#allocation5 + $0xc] sm:$0xf]
    %v92 = vld [vmem:[#allocation5 + $0x10] sm:$0xf]
    %v93 = vld [vmem:[#allocation5 + $0x14] sm:$0xf]
    %v94 = vld [vmem:[#allocation5 + $0x18] sm:$0xf]
    %v95 = vld [vmem:[#allocation5 + $0x1c] sm:$0xf]
    %v96 = vld [vmem:[#allocation5 + $0x20] sm:$0xf]
    %v97 = vld [vmem:[#allocation5 + $0x24] sm:$0xf]
    %v98 = vld [vmem:[#allocation5 + $0x28] sm:$0xf]
    %v99 = vld [vmem:[#allocation5 + $0x2c] sm:$0xf]
    %v100 = vld [vmem:[#allocation5 + $0x30] sm:$0xf]
    %v101 = vld [vmem:[#allocation5 + $0x34] sm:$0xf]
    %v102 = vld [vmem:[#allocation5 + $0x38] sm:$0xf]
    %v103 = vld [vmem:[#allocation5 + $0x3c] sm:$0xf]
    %v104 = vld [vmem:[%s2] sm:$0x1]
    %v106 = vlaneseq
    %v107 = vshrl.u32 %v106, 7
    %v108 = vsub.s32 0, %v107
    %v109 = vrot.slane %v104, %v108
    %v113 = vunpack.c.l.b16 %v86
    %v114 = vunpack.c.l.b16 %v87
    %v115 = vpack.c.b16 %v114, %v113
    %v133 = vunpack.c.l.b16 %v88
    %v134 = vunpack.c.l.b16 %v89
    %v135 = vunpack.c.l.b16 %v90
    %v136 = vunpack.c.l.b16 %v91
    %v137 = vunpack.c.l.b16 %v92
    %v138 = vunpack.c.l.b16 %v93
    %v139 = vunpack.c.l.b16 %v94
    %v140 = vunpack.c.l.b16 %v95
    %v141 = vunpack.c.l.b16 %v96
    %v142 = vunpack.c.l.b16 %v97
    %v143 = vunpack.c.l.b16 %v98
    %v144 = vunpack.c.l.b16 %v99
    %v145 = vunpack.c.l.b16 %v100
    %v146 = vunpack.c.l.b16 %v101
    %v147 = vunpack.c.l.b16 %v102
    %v148 = vunpack.c.l.b16 %v103
    %v149 = vpack.c.b16 %v134, %v133
    %v150 = vpack.c.b16 %v136, %v135
    %v151 = vpack.c.b16 %v138, %v137
    %v152 = vpack.c.b16 %v140, %v139
    %v153 = vpack.c.b16 %v142, %v141
    %v154 = vpack.c.b16 %v144, %v143
    %v155 = vpack.c.b16 %v146, %v145
    %v156 = vpack.c.b16 %v148, %v147
    %165 = vmatprep.subr.bf16.mxu0 0
    %166 = vmatpush1.bf16.msra.mxu0 %v149
    %167 = vmatprep.subr.bf16.mxu0 0
    %168 = vmatpush1.bf16.msra.mxu0 %v150
    %169 = vmatprep.subr.bf16.mxu0 0
    %170 = vmatpush1.bf16.msra.mxu0 %v151
    %171 = vmatprep.subr.bf16.mxu0 0
    %172 = vmatpush1.bf16.msra.mxu0 %v152
    %173 = vmatprep.subr.bf16.mxu0 0
    %174 = vmatpush1.bf16.msra.mxu0 %v153
    %175 = vmatprep.subr.bf16.mxu0 0
    %176 = vmatpush1.bf16.msra.mxu0 %v154
    %177 = vmatprep.subr.bf16.mxu0 0
    %178 = vmatpush1.bf16.msra.mxu0 %v155
    %179 = vmatprep.subr.bf16.mxu0 0
    %180 = vmatpush1.bf16.msra.mxu0 %v156
    %181 = vmatprep.subr.bf16.mxu0 0
    %182 = vmatpush1.bf16.msra.mxu0 0
    %183 = vmatprep.subr.bf16.mxu0 0
    %184 = vmatpush1.bf16.msra.mxu0 0
    %185 = vmatprep.subr.bf16.mxu0 0
    %186 = vmatpush1.bf16.msra.mxu0 0
    %187 = vmatprep.subr.bf16.mxu0 0
    %188 = vmatpush1.bf16.msra.mxu0 0
    %189 = vmatprep.subr.bf16.mxu0 0
    %190 = vmatpush1.bf16.msra.mxu0 0
    %191 = vmatprep.subr.bf16.mxu0 0
    %192 = vmatpush1.bf16.msra.mxu0 0
    %193 = vmatprep.subr.bf16.mxu0 0
    %194 = vmatpush1.bf16.msra.mxu0 0
    %195 = vmatprep.subr.bf16.mxu0 0
    %196 = vmatpush1.bf16.msra.mxu0 0
    %197 = vmatprep.mubr.bf16.mxu0 0
    %198 = vmatmul.mubr.bf16.gmra.mrb[0].mxu0 %v115
    %v199 = vpop.f32.mrb[0].mxu0
    %v200 = vadd.f32 %v109, %v199
    %v201 = vpop.f32.mrb[0].mxu0
    %v202 = vpop.f32.mrb[0].mxu0
    %v203 = vadd.f32 %v109, %v202
    %v204 = vpop.f32.mrb[0].mxu0
    %205 = vdwg.mxu0
    %v206 = vtanh.pop %v200
    %v207 = vtanh.pop %v203
    %v208 = vrot.slane %v206, 4
    %v209 = vadd.f32 %v206, %v208
    %v210 = vrot.slane %v209, 2
    %v211 = vadd.f32 %v209, %v210
    %v212 = vrot.slane %v211, 1
    %v213 = vadd.f32 %v211, %v212
    %v214 = vrot.slane %v207, 4
    %v215 = vadd.f32 %v207, %v214
    %v216 = vrot.slane %v215, 2
    %v217 = vadd.f32 %v215, %v216
    %v218 = vrot.slane %v217, 1
    %v219 = vadd.f32 %v217, %v218
    %v220 = vrcp.pop 8.0
    %v221 = vmul.f32 %v213, %v220
    %v222 = vmul.f32 %v219, %v220
    %v223 = vpack.c.bf16 %v221, %v221
    %v224 = vpack.c.bf16 %v222, %v222
    %v225 = vld [vmem:[#allocation7] sm:$0xf]
    %v226 = vld [vmem:[#allocation7 + $0x4] sm:$0xf]
    %v227 = vld [vmem:[#allocation7 + $0x8] sm:$0xf]
    %v228 = vld [vmem:[#allocation7 + $0xc] sm:$0xf]
    %v229 = vld [vmem:[#allocation7 + $0x10] sm:$0xf]
    %v230 = vld [vmem:[#allocation7 + $0x14] sm:$0xf]
    %v231 = vld [vmem:[#allocation7 + $0x18] sm:$0xf]
    %v232 = vld [vmem:[#allocation7 + $0x1c] sm:$0xf]
    %v233 = vld [vmem:[#allocation7 + $0x20] sm:$0xf]
    %v234 = vld [vmem:[#allocation7 + $0x24] sm:$0xf]
    %v235 = vld [vmem:[#allocation7 + $0x28] sm:$0xf]
    %v236 = vld [vmem:[#allocation7 + $0x2c] sm:$0xf]
    %v237 = vld [vmem:[#allocation7 + $0x30] sm:$0xf]
    %v238 = vld [vmem:[#allocation7 + $0x34] sm:$0xf]
    %v239 = vld [vmem:[#allocation7 + $0x38] sm:$0xf]
    %v240 = vld [vmem:[#allocation7 + $0x3c] sm:$0xf]
    %v241 = vld [vmem:[%s4] sm:$0x1]
    %v243 = vlaneseq
    %v244 = vshrl.u32 %v243, 7
    %v245 = vsub.s32 0, %v244
    %v246 = vrot.slane %v241, %v245
    %v250 = vunpack.c.l.b16 %v223
    %v251 = vunpack.c.l.b16 %v224
    %vm252 = vcmask 1041409
    %v253 = vsel %vm252, %v251, %v250
    %v254 = vpack.c.b16 %v253, %v253
    %v272 = vunpack.c.l.b16 %v225
    %v273 = vunpack.c.l.b16 %v226
    %v274 = vunpack.c.l.b16 %v227
    %v275 = vunpack.c.l.b16 %v228
    %v276 = vunpack.c.l.b16 %v229
    %v277 = vunpack.c.l.b16 %v230
    %v278 = vunpack.c.l.b16 %v231
    %v279 = vunpack.c.l.b16 %v232
    %v280 = vunpack.c.l.b16 %v233
    %v281 = vunpack.c.l.b16 %v234
    %v282 = vunpack.c.l.b16 %v235
    %v283 = vunpack.c.l.b16 %v236
    %v284 = vunpack.c.l.b16 %v237
    %v285 = vunpack.c.l.b16 %v238
    %v286 = vunpack.c.l.b16 %v239
    %v287 = vunpack.c.l.b16 %v240
    %v288 = vpack.c.b16 %v273, %v272
    %v289 = vpack.c.b16 %v275, %v274
    %v290 = vpack.c.b16 %v277, %v276
    %v291 = vpack.c.b16 %v279, %v278
    %v292 = vpack.c.b16 %v281, %v280
    %v293 = vpack.c.b16 %v283, %v282
    %v294 = vpack.c.b16 %v285, %v284
    %v295 = vpack.c.b16 %v287, %v286
    %304 = vmatprep.subr.bf16.mxu0 0
    %305 = vmatpush1.bf16.msra.mxu0 %v288
    %306 = vmatprep.subr.bf16.mxu0 0
    %307 = vmatpush1.bf16.msra.mxu0 %v289
    %308 = vmatprep.subr.bf16.mxu0 0
    %309 = vmatpush1.bf16.msra.mxu0 %v290
    %310 = vmatprep.subr.bf16.mxu0 0
    %311 = vmatpush1.bf16.msra.mxu0 %v291
    %312 = vmatprep.subr.bf16.mxu0 0
    %313 = vmatpush1.bf16.msra.mxu0 %v292
    %314 = vmatprep.subr.bf16.mxu0 0
    %315 = vmatpush1.bf16.msra.mxu0 %v293
    %316 = vmatprep.subr.bf16.mxu0 0
    %317 = vmatpush1.bf16.msra.mxu0 %v294
    %318 = vmatprep.subr.bf16.mxu0 0
    %319 = vmatpush1.bf16.msra.mxu0 %v295
    %320 = vmatprep.subr.bf16.mxu0 0
    %321 = vmatpush1.bf16.msra.mxu0 0
    %322 = vmatprep.subr.bf16.mxu0 0
    %323 = vmatpush1.bf16.msra.mxu0 0
    %324 = vmatprep.subr.bf16.mxu0 0
    %325 = vmatpush1.bf16.msra.mxu0 0
    %326 = vmatprep.subr.bf16.mxu0 0
    %327 = vmatpush1.bf16.msra.mxu0 0
    %328 = vmatprep.subr.bf16.mxu0 0
    %329 = vmatpush1.bf16.msra.mxu0 0
    %330 = vmatprep.subr.bf16.mxu0 0
    %331 = vmatpush1.bf16.msra.mxu0 0
    %332 = vmatprep.subr.bf16.mxu0 0
    %333 = vmatpush1.bf16.msra.mxu0 0
    %334 = vmatprep.subr.bf16.mxu0 0
    %335 = vmatpush1.bf16.msra.mxu0 0
    %336 = vmatprep.mubr.bf16.mxu0 0
    %337 = vmatmul.mubr.bf16.gmra.mrb[0].mxu0 %v254
    %v338 = vpop.f32.mrb[0].mxu0
    %v339 = vadd.f32 %v246, %v338
    %v340 = vpop.f32.mrb[0].mxu0
    %v341 = vpop.f32.mrb[0].mxu0
    %v342 = vpop.f32.mrb[0].mxu0
    %343 = vdwg.mxu0
    %vm344 = vcmask 1041408
    %v345 = vsel %vm344, %v339, -inf
    %346 = vmax.xlane.f32.xlu0 %v345
    %v347 = vpop.xlane.xlu0 %346
    %v348 = vsub.f32 %v339, %v347
    %v349 = vmul.f32 %v348, 1.442695
    %v350 = vpow.pop %v349
    %v351 = vsel %vm344, %v350, 0.0
    %352 = vadd.xlane.f32.xlu0 %v351
    %v353 = vpop.xlane.xlu0 %352
    %v354 = vrcp.pop %v353
    %v355 = vmul.f32 %v350, %v354
    %356 = vst [vmem:[#allocation11] sm:$0x3] %v355
    %v357 = vadd.f32 %v206, %v221
    %v358 = vadd.f32 %v207, %v222
    %v359 = vpack.c.bf16 %v358, %v357
    %v360 = vld [vmem:[#allocation8] sm:$0xf]
    %v361 = vld [vmem:[#allocation8 + $0x4] sm:$0xf]
    %v362 = vld [vmem:[#allocation8 + $0x8] sm:$0xf]
    %v363 = vld [vmem:[#allocation8 + $0xc] sm:$0xf]
    %v364 = vld [vmem:[#allocation8 + $0x10] sm:$0xf]
    %v365 = vld [vmem:[#allocation8 + $0x14] sm:$0xf]
    %v366 = vld [vmem:[#allocation8 + $0x18] sm:$0xf]
    %v367 = vld [vmem:[#allocation8 + $0x1c] sm:$0xf]
    %v368 = vld [vmem:[#allocation8 + $0x20] sm:$0xf]
    %v369 = vld [vmem:[#allocation8 + $0x24] sm:$0xf]
    %v370 = vld [vmem:[#allocation8 + $0x28] sm:$0xf]
    %v371 = vld [vmem:[#allocation8 + $0x2c] sm:$0xf]
    %v372 = vld [vmem:[#allocation8 + $0x30] sm:$0xf]
    %v373 = vld [vmem:[#allocation8 + $0x34] sm:$0xf]
    %v374 = vld [vmem:[#allocation8 + $0x38] sm:$0xf]
    %v375 = vld [vmem:[#allocation8 + $0x3c] sm:$0xf]
    %v376 = vld [vmem:[%s6] sm:$0x1]
    %v378 = vlaneseq
    %v379 = vshrl.u32 %v378, 7
    %v380 = vsub.s32 0, %v379
    %v381 = vrot.slane %v376, %v380
    %v399 = vunpack.c.l.b16 %v360
    %v400 = vunpack.c.l.b16 %v361
    %v401 = vunpack.c.l.b16 %v362
    %v402 = vunpack.c.l.b16 %v363
    %v403 = vunpack.c.l.b16 %v364
    %v404 = vunpack.c.l.b16 %v365
    %v405 = vunpack.c.l.b16 %v366
    %v406 = vunpack.c.l.b16 %v367
    %v407 = vunpack.c.l.b16 %v368
    %v408 = vunpack.c.l.b16 %v369
    %v409 = vunpack.c.l.b16 %v370
    %v410 = vunpack.c.l.b16 %v371
    %v411 = vunpack.c.l.b16 %v372
    %v412 = vunpack.c.l.b16 %v373
    %v413 = vunpack.c.l.b16 %v374
    %v414 = vunpack.c.l.b16 %v375
    %v415 = vpack.c.b16 %v400, %v399
    %v416 = vpack.c.b16 %v402, %v401
    %v417 = vpack.c.b16 %v404, %v403
    %v418 = vpack.c.b16 %v406, %v405
    %v419 = vpack.c.b16 %v408, %v407
    %v420 = vpack.c.b16 %v410, %v409
    %v421 = vpack.c.b16 %v412, %v411
    %v422 = vpack.c.b16 %v414, %v413
    %431 = vmatprep.subr.bf16.mxu0 0
    %432 = vmatpush1.bf16.msra.mxu0 %v415
    %433 = vmatprep.subr.bf16.mxu0 0
    %434 = vmatpush1.bf16.msra.mxu0 %v416
    %435 = vmatprep.subr.bf16.mxu0 0
    %436 = vmatpush1.bf16.msra.mxu0 %v417
    %437 = vmatprep.subr.bf16.mxu0 0
    %438 = vmatpush1.bf16.msra.mxu0 %v418
    %439 = vmatprep.subr.bf16.mxu0 0
    %440 = vmatpush1.bf16.msra.mxu0 %v419
    %441 = vmatprep.subr.bf16.mxu0 0
    %442 = vmatpush1.bf16.msra.mxu0 %v420
    %443 = vmatprep.subr.bf16.mxu0 0
    %444 = vmatpush1.bf16.msra.mxu0 %v421
    %445 = vmatprep.subr.bf16.mxu0 0
    %446 = vmatpush1.bf16.msra.mxu0 %v422
    %447 = vmatprep.subr.bf16.mxu0 0
    %448 = vmatpush1.bf16.msra.mxu0 0
    %449 = vmatprep.subr.bf16.mxu0 0
    %450 = vmatpush1.bf16.msra.mxu0 0
    %451 = vmatprep.subr.bf16.mxu0 0
    %452 = vmatpush1.bf16.msra.mxu0 0
    %453 = vmatprep.subr.bf16.mxu0 0
    %454 = vmatpush1.bf16.msra.mxu0 0
    %455 = vmatprep.subr.bf16.mxu0 0
    %456 = vmatpush1.bf16.msra.mxu0 0
    %457 = vmatprep.subr.bf16.mxu0 0
    %458 = vmatpush1.bf16.msra.mxu0 0
    %459 = vmatprep.subr.bf16.mxu0 0
    %460 = vmatpush1.bf16.msra.mxu0 0
    %461 = vmatprep.subr.bf16.mxu0 0
    %462 = vmatpush1.bf16.msra.mxu0 0
    %463 = vmatprep.mubr.bf16.mxu0 0
    %464 = vmatmul.mubr.bf16.gmra.mrb[0].mxu0 %v359
    %v465 = vpop.f32.mrb[0].mxu0
    %v466 = vadd.f32 %v381, %v465
    %v467 = vpop.f32.mrb[0].mxu0
    %v468 = vpop.f32.mrb[0].mxu0
    %v469 = vadd.f32 %v381, %v468
    %v470 = vpop.f32.mrb[0].mxu0
    %471 = vdwg.mxu0
    %472 = vst [vmem:[#allocation10] sm:$0xff] %v466
    %473 = vst [vmem:[#allocation10 + $0x8] sm:$0xff] %v469
    // Predicated region
    $region46: #{tpu_custom_call.1} parent=1 // pred_check
      _
    $region47: #{tpu_custom_call.1} parent=1 // pred_check_branch
      %475 = sbr.rel (0) target = $region49
    $region48: #{tpu_custom_call.1} parent=1 // pred_region
      %s477 = ssub.s32 256, 256
      %478 = vsyncadd [#allocation4], %s477
      %s479 = sshll.u32 [#allocation10], 4
      %s480 = int_to_ptr.vmem [resolvable:$true] %s479
      %485 = dma.vmem_to_hbm [thread:$0]  %s480, 256, %s7, [#allocation4], 128, 128, 8
    $region49: #{tpu_custom_call.1} parent=1 // pred_fallthru
      _
    // Predicated region
    $region50: #{tpu_custom_call.1} parent=1 // pred_check
      _
    $region51: #{tpu_custom_call.1} parent=1 // pred_check_branch
      %487 = sbr.rel (0) target = $region53
    $region52: #{tpu_custom_call.1} parent=1 // pred_region
      %s489 = ssub.s32 32, 32
      %490 = vsyncadd [#allocation12], %s489
      %s492 = sshll.u32 [#allocation11], 4
      %s493 = int_to_ptr.vmem [resolvable:$true] %s492
      %495 = dma.vmem_to_hbm [thread:$0]  %s493, 32, %s8, [#allocation12]
    $region53: #{tpu_custom_call.1} parent=1 // pred_fallthru
      _
    // Predicated region
    $region54: #{tpu_custom_call.1} parent=1 // pred_check
      _
    $region55: #{tpu_custom_call.1} parent=1 // pred_check_branch
      %497 = sbr.rel (0) target = $region57
    $region56: #{tpu_custom_call.1} parent=1 // pred_region
      %498 = dma.done [#allocation4], 256
    $region57: #{tpu_custom_call.1} parent=1 // pred_fallthru
      _
    // Predicated region
    $region58: #{tpu_custom_call.1} parent=1 // pred_check
      _
    $region59: #{tpu_custom_call.1} parent=1 // pred_check_branch
      %500 = sbr.rel (0) target = $region61
    $region60: #{tpu_custom_call.1} parent=1 // pred_region
      %501 = dma.done [#allocation12], 32
    $region61: #{tpu_custom_call.1} parent=1 // pred_fallthru
      _
    %502 = vsyncpa [#allocation3], 1
    %503 = vsyncpa [#allocation6], 1
    %504 = vsyncpa [#allocation9], 1
    %505 = vsyncpa [#allocation4], 1
    %506 = vsyncpa [#allocation12], 1

</llo_original>
